<compile_context>
chip_gen: v5e
topology: v5e:2x2
jax: 0.10.0
libtpu: 0.0.40
codegen_flags: <defaults>
</compile_context>

<pallas_src>
import jax
import jax.numpy as jnp
from jax.experimental import pallas as pl
from jax.experimental.pallas import tpu as pltpu


# -----------------------------------------------------------------------------
# Fused ProposalModule kernel (channel-major, im2col conv + fused heads).
#   cols : (9*Cin, TN)   im2col patches, lane dim = flattened (b, h, w)
#   w1   : (Chid, 9*Cin) conv1 weight, row order (cin, kh, kw)
#   b1   : (Chid, 1)
#   wh   : (A+4A, Chid)  concatenated conf|reg 1x1 head weights
#   bh   : (A+4A, 1)
#   out  : (A+4A, TN)    lane-dense combined head output
# -----------------------------------------------------------------------------
def proposal_kernel(cols_ref, w1_ref, b1_ref, wh_ref, bh_ref, out_ref):
    # conv3x3 as one K=9*Cin matmul on the MXU
    hidden = jnp.dot(w1_ref[...], cols_ref[...],
                     preferred_element_type=jnp.float32)
    # dropout (identity, eval semantics) then bias + ReLU
    hidden = jnp.maximum(hidden + b1_ref[...], 0.0)
    # fused conf + reg 1x1 heads, single lane-dense store
    out_ref[...] = (jnp.dot(wh_ref[...], hidden,
                            preferred_element_type=jnp.float32) + bh_ref[...])


def proposal_module_forward(x_nchw, w1, b1, wh, bh):
    """Returns the combined head output as (B, A+4A, H*W) (NCHW element order)."""
    B, Cin, H, W = x_nchw.shape
    Chid = w1.shape[0]
    A5 = wh.shape[0]
    HW = H * W
    N = B * HW
    K9 = 9 * Cin

    # im2col in the wrapper (pure layout plumbing for XLA):
    # cols[(cin*9 + kh*3 + kw), b*HW + h*W + w] = x_pad[b, cin, h+kh, w+kw]
    xp = jnp.pad(x_nchw, ((0, 0), (0, 0), (1, 1), (1, 1)))
    taps = [xp[:, :, kh:kh + H, kw:kw + W] for kh in range(3) for kw in range(3)]
    cols = jnp.stack(taps, axis=2)                       # (B, Cin, 9, H, W)
    cols = cols.reshape(B, K9, HW)
    cols = jnp.transpose(cols, (1, 0, 2)).reshape(K9, N)  # (9*Cin, B*HW)

    # One grid step at the test shape (batch folded into the lane dim); the
    # lane-tile axis is marked "parallel" so larger N shards across TCs (v7x)
    # and bounds per-step VMEM on real backbone feature maps.
    tn = min(N, 1024)
    grid = (pl.cdiv(N, tn),)

    out = pl.pallas_call(
        proposal_kernel,
        out_shape=jax.ShapeDtypeStruct((A5, N), jnp.float32),
        grid=grid,
        in_specs=[
            pl.BlockSpec((K9, tn), lambda j: (0, j)),     # cols (streamed)
            pl.BlockSpec((Chid, K9), lambda j: (0, 0)),   # w1   (resident)
            pl.BlockSpec((Chid, 1), lambda j: (0, 0)),    # b1
            pl.BlockSpec((A5, Chid), lambda j: (0, 0)),   # wh
            pl.BlockSpec((A5, 1), lambda j: (0, 0)),      # bh
        ],
        out_specs=pl.BlockSpec((A5, tn), lambda j: (0, j)),
        compiler_params=pltpu.CompilerParams(
            dimension_semantics=("parallel",)),
    )(cols, w1, b1, wh, bh)

    # (A+4A, B*HW) -> (B, A+4A, HW): exactly NCHW flatten order of the heads.
    return jnp.transpose(out.reshape(A5, B, HW), (1, 0, 2))


# -----------------------------------------------------------------------------
# RPN loss (48 logits + 16x4 offsets) in plain JAX per the performance review.
# -----------------------------------------------------------------------------
def rpn_loss(conf_pos, conf_neg, gt_offsets, offsets_pos, *, batch_size,
             w_conf=1.0, w_reg=5.0, beta=1.0 / 9.0):
    # BCE-with-logits, sum reduction: target 1 for pos, 0 for neg.
    cls_loss = (jnp.sum(jax.nn.softplus(-conf_pos)) +
                jnp.sum(jax.nn.softplus(conf_neg))) / batch_size
    d = offsets_pos - gt_offsets
    ad = jnp.abs(d)
    sl1 = jnp.where(ad < beta, 0.5 * d * d / beta, ad - 0.5 * beta)
    reg_loss = jnp.sum(sl1) / offsets_pos.shape[0]
    return w_conf * cls_loss + w_reg * reg_loss


# -----------------------------------------------------------------------------
# RegionProposalNetwork forward (training-mode semantics) using the kernel.
# -----------------------------------------------------------------------------
def rpn_forward(feature_map_nchw, params, pos_anc_ind, neg_anc_ind,
                gt_offsets, batch_size):
    A = params["n_anchors"]
    head = proposal_module_forward(feature_map_nchw, params["w1"], params["b1"],
                                   params["wh"], params["bh"])
    conf = head[:, :A, :]          # (B, A, H*W)   == conf_scores_pred NCHW
    reg = head[:, A:, :]           # (B, 4A, H*W)  == reg_offsets_pred NCHW

    conf_flat = conf.reshape(-1)           # matches .flatten()
    reg_rows = reg.reshape(-1, 4)          # matches .view(-1, 4)

    conf_scores_pos = conf_flat[pos_anc_ind]
    conf_scores_neg = conf_flat[neg_anc_ind]
    offsets_pos = reg_rows[pos_anc_ind]

    total_loss = rpn_loss(conf_scores_pos, conf_scores_neg, gt_offsets,
                          offsets_pos, batch_size=batch_size,
                          w_conf=1.0, w_reg=5.0)
    return total_loss, conf, reg, offsets_pos


# -----------------------------------------------------------------------------
# Pure-JAX reference (PyTorch conventions) for verification.
# -----------------------------------------------------------------------------
def rpn_reference(feature_map_nchw, w1_oihw, b1, wc_oihw, bc, wr_oihw, br,
                  pos_anc_ind, neg_anc_ind, gt_offsets, batch_size):
    hp = jax.lax.Precision.HIGHEST
    out = jax.lax.conv_general_dilated(
        feature_map_nchw, w1_oihw, (1, 1), ((1, 1), (1, 1)),
        dimension_numbers=("NCHW", "OIHW", "NCHW"), precision=hp)
    out = jnp.maximum(out + b1[None, :, None, None], 0.0)
    conf = jnp.einsum("bchw,ac->bahw", out, wc_oihw[:, :, 0, 0],
                      precision=hp) + bc[None, :, None, None]
    reg = jnp.einsum("bchw,ac->bahw", out, wr_oihw[:, :, 0, 0],
                     precision=hp) + br[None, :, None, None]
    conf_flat = conf.reshape(-1)
    reg_rows = reg.reshape(-1, 4)
    cp, cn = conf_flat[pos_anc_ind], conf_flat[neg_anc_ind]
    op = reg_rows[pos_anc_ind]
    cls = (jnp.sum(jax.nn.softplus(-cp)) + jnp.sum(jax.nn.softplus(cn))) / batch_size
    beta = 1.0 / 9.0
    d = op - gt_offsets
    ad = jnp.abs(d)
    sl1 = jnp.where(ad < beta, 0.5 * d * d / beta, ad - 0.5 * beta)
    regl = jnp.sum(sl1) / op.shape[0]
    return 1.0 * cls + 5.0 * regl


if __name__ == "__main__":
    # Small, module-consistent shapes: feature map (B, C, H, W), 9 anchors/loc.
    B, C, H, W = 2, 8, 16, 16
    HIDDEN = 32
    N_ANC = 9                      # len(anc_scales) * len(anc_ratios) = 3*3
    N_POS, N_NEG = 16, 32

    key = jax.random.PRNGKey(0)
    ks = jax.random.split(key, 10)

    feature_map = jax.random.normal(ks[0], (B, C, H, W), jnp.float32)

    # Deterministic parameter init (shapes per ProposalModule.__init__).
    w1_oihw = jax.random.normal(ks[1], (HIDDEN, C, 3, 3), jnp.float32) * 0.1
    b1 = jax.random.normal(ks[2], (HIDDEN,), jnp.float32) * 0.1
    wc_oihw = jax.random.normal(ks[3], (N_ANC, HIDDEN, 1, 1), jnp.float32) * 0.1
    bc = jax.random.normal(ks[4], (N_ANC,), jnp.float32) * 0.1
    wr_oihw = jax.random.normal(ks[5], (4 * N_ANC, HIDDEN, 1, 1), jnp.float32) * 0.1
    br = jax.random.normal(ks[6], (4 * N_ANC,), jnp.float32) * 0.1

    # Kernel-layout parameters (done once in the wrapper, stays resident in VMEM):
    #   w1: (Chid, 9*Cin) with row order (cin, kh, kw)  == OIHW reshape
    #   wh: conf|reg heads concatenated -> one matmul, one lane-dense store
    params = dict(
        n_anchors=N_ANC,
        w1=w1_oihw.reshape(HIDDEN, C * 9),
        b1=b1.reshape(HIDDEN, 1),
        wh=jnp.concatenate([wc_oihw[:, :, 0, 0], wr_oihw[:, :, 0, 0]], axis=0),
        bh=jnp.concatenate([bc, br]).reshape(5 * N_ANC, 1),
    )

    # Synthetic anchor-matching outputs (stand-ins for get_req_anchors).
    n_total = B * N_ANC * H * W
    pos_anc_ind = jax.random.randint(ks[7], (N_POS,), 0, n_total)
    neg_anc_ind = jax.random.randint(ks[8], (N_NEG,), 0, n_total)
    gt_offsets = jax.random.normal(ks[9], (N_POS, 4), jnp.float32) * 0.2

    total_loss, conf, reg, offsets_pos = rpn_forward(
        feature_map, params, pos_anc_ind, neg_anc_ind, gt_offsets, B)
    total_loss = jax.block_until_ready(total_loss)

    ref_loss = rpn_reference(feature_map, w1_oihw, b1, wc_oihw, bc, wr_oihw,
                             br, pos_anc_ind, neg_anc_ind, gt_offsets, B)
    assert jnp.allclose(total_loss, ref_loss, rtol=1e-3, atol=1e-3), (
        total_loss, ref_loss)

    print("KERNEL_OK")
</pallas_src>

<mosaic_0001>
module attributes {stable_mosaic.version = 11 : i64} {
  func.func @proposal_kernel(%arg0: i32, %arg1: memref<72x512xf32, #tpu.memory_space<vmem>>, %arg2: memref<32x72xf32, #tpu.memory_space<vmem>>, %arg3: memref<32x1xf32, #tpu.memory_space<vmem>>, %arg4: memref<45x32xf32, #tpu.memory_space<vmem>>, %arg5: memref<45x1xf32, #tpu.memory_space<vmem>>, %arg6: memref<45x512xf32, #tpu.memory_space<vmem>>) attributes {dimension_semantics = [#tpu.dimension_semantics<parallel>], iteration_bounds = array<i64: 1>, scalar_prefetch = 0 : i64, scratch_operands = 0 : i64, tpu.core_type = #tpu.core_type<tc>, window_params = [{transform_indices = @transform_0, window_bounds = array<i64: 72, 512>}, {pipeline_mode = #tpu.pipeline_mode<synchronous>, transform_indices = @transform_1, window_bounds = array<i64: 32, 72>}, {pipeline_mode = #tpu.pipeline_mode<synchronous>, transform_indices = @transform_2, window_bounds = array<i64: 32, 1>}, {pipeline_mode = #tpu.pipeline_mode<synchronous>, transform_indices = @transform_3, window_bounds = array<i64: 45, 32>}, {pipeline_mode = #tpu.pipeline_mode<synchronous>, transform_indices = @transform_4, window_bounds = array<i64: 45, 1>}, {transform_indices = @transform_5, window_bounds = array<i64: 45, 512>}]} {
    %c0 = arith.constant 0 : index
    %c0_0 = arith.constant 0 : index
    %0 = vector.load %arg2[%c0, %c0_0] : memref<32x72xf32, #tpu.memory_space<vmem>>, vector<32x72xf32>
    %c0_1 = arith.constant 0 : index
    %c0_2 = arith.constant 0 : index
    %1 = vector.load %arg1[%c0_1, %c0_2] : memref<72x512xf32, #tpu.memory_space<vmem>>, vector<72x512xf32>
    %cst = arith.constant dense<0.000000e+00> : vector<32x512xf32>
    %2 = tpu.matmul %0, %1, %cst {dimension_numbers = #tpu.dot_dimension_numbers<[1], [0], [0], [1], [0, 0, 1, 1], [], []>} : vector<32x72xf32>, vector<72x512xf32>, vector<32x512xf32> -> vector<32x512xf32>
    %c0_3 = arith.constant 0 : index
    %c0_4 = arith.constant 0 : index
    %3 = vector.load %arg3[%c0_3, %c0_4] : memref<32x1xf32, #tpu.memory_space<vmem>>, vector<32x1xf32>
    %4 = vector.broadcast %3 : vector<32x1xf32> to vector<32x512xf32>
    %5 = arith.addf %2, %4 : vector<32x512xf32>
    %cst_5 = arith.constant 0.000000e+00 : f32
    %6 = vector.broadcast %cst_5 : f32 to vector<32x512xf32>
    %7 = arith.maximumf %5, %6 : vector<32x512xf32>
    %c0_6 = arith.constant 0 : index
    %c0_7 = arith.constant 0 : index
    %8 = vector.load %arg4[%c0_6, %c0_7] : memref<45x32xf32, #tpu.memory_space<vmem>>, vector<45x32xf32>
    %cst_8 = arith.constant dense<0.000000e+00> : vector<45x512xf32>
    %9 = tpu.matmul %8, %7, %cst_8 {dimension_numbers = #tpu.dot_dimension_numbers<[1], [0], [0], [1], [0, 0, 1, 1], [], []>} : vector<45x32xf32>, vector<32x512xf32>, vector<45x512xf32> -> vector<45x512xf32>
    %c0_9 = arith.constant 0 : index
    %c0_10 = arith.constant 0 : index
    %10 = vector.load %arg5[%c0_9, %c0_10] : memref<45x1xf32, #tpu.memory_space<vmem>>, vector<45x1xf32>
    %11 = vector.broadcast %10 : vector<45x1xf32> to vector<45x512xf32>
    %12 = arith.addf %9, %11 : vector<45x512xf32>
    %c0_11 = arith.constant 0 : index
    %c0_12 = arith.constant 0 : index
    %13 = vector.load %arg6[%c0_11, %c0_12] : memref<45x512xf32, #tpu.memory_space<vmem>>, vector<45x512xf32>
    tpu.vector_store %arg6[%c0_11, %c0_12], %12 {strides = array<i32>} : memref<45x512xf32, #tpu.memory_space<vmem>>, vector<45x512xf32>,
    return
  }
  func.func @transform_0(%arg0: i32) -> (i32, i32) {
    %c0_i32 = arith.constant 0 : i32
    %c0_i32_0 = arith.constant 0 : i32
    return %c0_i32, %arg0 : i32, i32
  }
  func.func @transform_1(%arg0: i32) -> (i32, i32) {
    %c0_i32 = arith.constant 0 : i32
    %c0_i32_0 = arith.constant 0 : i32
    %c0_i32_1 = arith.constant 0 : i32
    return %c0_i32, %c0_i32_0 : i32, i32
  }
  func.func @transform_2(%arg0: i32) -> (i32, i32) {
    %c0_i32 = arith.constant 0 : i32
    %c0_i32_0 = arith.constant 0 : i32
    %c0_i32_1 = arith.constant 0 : i32
    return %c0_i32, %c0_i32_0 : i32, i32
  }
  func.func @transform_3(%arg0: i32) -> (i32, i32) {
    %c0_i32 = arith.constant 0 : i32
    %c0_i32_0 = arith.constant 0 : i32
    %c0_i32_1 = arith.constant 0 : i32
    return %c0_i32, %c0_i32_0 : i32, i32
  }
  func.func @transform_4(%arg0: i32) -> (i32, i32) {
    %c0_i32 = arith.constant 0 : i32
    %c0_i32_0 = arith.constant 0 : i32
    %c0_i32_1 = arith.constant 0 : i32
    return %c0_i32, %c0_i32_0 : i32, i32
  }
  func.func @transform_5(%arg0: i32) -> (i32, i32) {
    %c0_i32 = arith.constant 0 : i32
    %c0_i32_0 = arith.constant 0 : i32
    return %c0_i32, %arg0 : i32, i32
  }
}

</mosaic_0001>

<llo_original>
// kernel: tpu_custom_call.1
$region0: #{tpu_custom_call.1}
  #allocation0 [shape = 'u32[]', space=smem, size = 0x4, offset = 0x4, fixed_abs, tag = 'smem constant byte address 0x4 - core index']
  #allocation1 [shape = 'u32[72,128]{1,0:T(1,128)}', space=vmem, size = 0x9000, scoped, tag = 'internal scratch']
  %s0 = inlined_call_operand.hbm [shape: f32[72,512], index: 0, kind: input, shape index: {}]
  %s1 = inlined_call_operand.vmem [shape: f32[32,72], index: 1, kind: input, shape index: {}]
  %s2 = inlined_call_operand.vmem [shape: f32[32,1], index: 2, kind: input, shape index: {}]
  %s3 = inlined_call_operand.vmem [shape: f32[45,32], index: 3, kind: input, shape index: {}]
  %s4 = inlined_call_operand.vmem [shape: f32[45,1], index: 4, kind: input, shape index: {}]
  %s5 = inlined_call_operand.hbm [shape: f32[45,512], index: 5, kind: output, shape index: {}]
  %s6 = sld [smem:[#allocation0]]
  $region34: #{tpu_custom_call.1} parent=0
    _
  %s8 = ssub.s32 1, %s6
  %s9 = scalar_select 0, %s8, %s6
  $region1: #{tpu_custom_call.1} parent=0
    #allocation2 [shape = 'u8[147456]{0}', space=vmem, size = 0x24000, scoped, tag = 'input window, operand 0, single buffered']
    #allocation3 [shape = 's32[1]{0}', space=sflag, size = 0x4, scoped, tag = 'scoped memory for tpu_custom_call.1']
    #allocation4 [shape = 's32[1]{0}', space=sflag, size = 0x4, scoped, tag = 'scoped memory for tpu_custom_call.1']
    #allocation5 [shape = 'u8[98304]{0}', space=vmem, size = 0x18000, scoped, tag = 'output window, operand 0, single buffered']
    %10 = vsyncpa [#allocation3], 0
    %11 = vsyncpa [#allocation4], 0
    // Predicated region
    $region2: #{tpu_custom_call.1} parent=1 // pred_check
      _
    $region3: #{tpu_custom_call.1} parent=1 // pred_check_branch
      %13 = sbr.rel (0) target = $region5
    $region4: #{tpu_custom_call.1} parent=1 // pred_region
      %15 = vsyncadd [#allocation3], 0
      %s16 = sshll.u32 %s0, 4
      %s17 = int_to_ptr.hbm [resolvable:$true] %s16
      %s18 = sshll.u32 [#allocation2], 4
      %s19 = int_to_ptr.vmem [resolvable:$true] %s18
      %24 = dma.hbm_to_vmem [thread:$0]  %s17, 4608, %s19, [#allocation3], 512, 512, 32
    $region5: #{tpu_custom_call.1} parent=1 // pred_fallthru
      _
    // Predicated region
    $region6: #{tpu_custom_call.1} parent=1 // pred_check
      _
    $region7: #{tpu_custom_call.1} parent=1 // pred_check_branch
      %26 = sbr.rel (0) target = $region9
    $region8: #{tpu_custom_call.1} parent=1 // pred_region
      _
    $region9: #{tpu_custom_call.1} parent=1 // pred_fallthru
      _
    // Predicated region
    $region10: #{tpu_custom_call.1} parent=1 // pred_check
      _
    $region11: #{tpu_custom_call.1} parent=1 // pred_check_branch
      %28 = sbr.rel (0) target = $region13
    $region12: #{tpu_custom_call.1} parent=1 // pred_region
      _
    $region13: #{tpu_custom_call.1} parent=1 // pred_fallthru
      _
    // Predicated region
    $region14: #{tpu_custom_call.1} parent=1 // pred_check
      _
    $region15: #{tpu_custom_call.1} parent=1 // pred_check_branch
      %30 = sbr.rel (0) target = $region17
    $region16: #{tpu_custom_call.1} parent=1 // pred_region
      _
    $region17: #{tpu_custom_call.1} parent=1 // pred_fallthru
      _
    // Predicated region
    $region18: #{tpu_custom_call.1} parent=1 // pred_check
      _
    $region19: #{tpu_custom_call.1} parent=1 // pred_check_branch
      %32 = sbr.rel (0) target = $region21
    $region20: #{tpu_custom_call.1} parent=1 // pred_region
      _
    $region21: #{tpu_custom_call.1} parent=1 // pred_fallthru
      _
    // Predicated region
    $region22: #{tpu_custom_call.1} parent=1 // pred_check
      _
    $region23: #{tpu_custom_call.1} parent=1 // pred_check_branch
      %34 = sbr.rel (0) target = $region25
    $region24: #{tpu_custom_call.1} parent=1 // pred_region
      %36 = dma.done [#allocation3], 4608
    $region25: #{tpu_custom_call.1} parent=1 // pred_fallthru
      _
    %v37 = vld [vmem:[%s1] sm:$0xff]
    %v38 = vld [vmem:[%s1 + $0x8] sm:$0xff]
    %v39 = vld [vmem:[%s1 + $0x10] sm:$0xff]
    %v40 = vld [vmem:[%s1 + $0x18] sm:$0xff]
    %v41 = vld [vmem:[#allocation2] sm:$0xff]
    %v42 = vld [vmem:[#allocation2 + $0x8] sm:$0xff]
    %v43 = vld [vmem:[#allocation2 + $0x10] sm:$0xff]
    %v44 = vld [vmem:[#allocation2 + $0x18] sm:$0xff]
    %v45 = vld [vmem:[#allocation2 + $0x20] sm:$0xff]
    %v46 = vld [vmem:[#allocation2 + $0x28] sm:$0xff]
    %v47 = vld [vmem:[#allocation2 + $0x30] sm:$0xff]
    %v48 = vld [vmem:[#allocation2 + $0x38] sm:$0xff]
    %v49 = vld [vmem:[#allocation2 + $0x40] sm:$0xff]
    %v50 = vld [vmem:[#allocation2 + $0x48] sm:$0xff]
    %v51 = vld [vmem:[#allocation2 + $0x50] sm:$0xff]
    %v52 = vld [vmem:[#allocation2 + $0x58] sm:$0xff]
    %v53 = vld [vmem:[#allocation2 + $0x60] sm:$0xff]
    %v54 = vld [vmem:[#allocation2 + $0x68] sm:$0xff]
    %v55 = vld [vmem:[#allocation2 + $0x70] sm:$0xff]
    %v56 = vld [vmem:[#allocation2 + $0x78] sm:$0xff]
    %v57 = vld [vmem:[#allocation2 + $0x80] sm:$0xff]
    %v58 = vld [vmem:[#allocation2 + $0x88] sm:$0xff]
    %v59 = vld [vmem:[#allocation2 + $0x90] sm:$0xff]
    %v60 = vld [vmem:[#allocation2 + $0x98] sm:$0xff]
    %v61 = vld [vmem:[#allocation2 + $0xa0] sm:$0xff]
    %v62 = vld [vmem:[#allocation2 + $0xa8] sm:$0xff]
    %v63 = vld [vmem:[#allocation2 + $0xb0] sm:$0xff]
    %v64 = vld [vmem:[#allocation2 + $0xb8] sm:$0xff]
    %v65 = vld [vmem:[#allocation2 + $0xc0] sm:$0xff]
    %v66 = vld [vmem:[#allocation2 + $0xc8] sm:$0xff]
    %v67 = vld [vmem:[#allocation2 + $0xd0] sm:$0xff]
    %v68 = vld [vmem:[#allocation2 + $0xd8] sm:$0xff]
    %v69 = vld [vmem:[#allocation2 + $0xe0] sm:$0xff]
    %v70 = vld [vmem:[#allocation2 + $0xe8] sm:$0xff]
    %v71 = vld [vmem:[#allocation2 + $0xf0] sm:$0xff]
    %v72 = vld [vmem:[#allocation2 + $0xf8] sm:$0xff]
    %v73 = vld [vmem:[#allocation2 + $0x100] sm:$0xff]
    %v74 = vld [vmem:[#allocation2 + $0x108] sm:$0xff]
    %v75 = vld [vmem:[#allocation2 + $0x110] sm:$0xff]
    %v76 = vld [vmem:[#allocation2 + $0x118] sm:$0xff]
    %v77 = vld [vmem:[%s2] sm:$0xff]
    %v78 = vld [vmem:[%s2 + $0x8] sm:$0xff]
    %v79 = vld [vmem:[%s2 + $0x10] sm:$0xff]
    %v80 = vld [vmem:[%s2 + $0x18] sm:$0xff]
    %82 = vset.pattern.permute.xlu0 0
    %83 = vperm.xlu0 %82, %v77
    %v84 = vpop.permute.xlu0 %83
    %87 = vset.pattern.permute.xlu0 0
    %88 = vperm.xlu0 %87, %v78
    %v89 = vpop.permute.xlu0 %88
    %92 = vset.pattern.permute.xlu0 0
    %93 = vperm.xlu0 %92, %v79
    %v94 = vpop.permute.xlu0 %93
    %97 = vset.pattern.permute.xlu0 0
    %98 = vperm.xlu0 %97, %v80
    %v99 = vpop.permute.xlu0 %98
    %vm101 = vcmask 588800
    %v103 = vsel %vm101, %v37, 0
    %v106 = vsel %vm101, %v38, 0
    %v109 = vsel %vm101, %v39, 0
    %v112 = vsel %vm101, %v40, 0
    %114 = vmatpush.msra.mxu0 0.0
    %115 = vmatpush.msra.mxu0 0.0
    %116 = vmatpush.msra.mxu0 0.0
    %117 = vmatpush.msra.mxu0 0.0
    %118 = vmatpush.msra.mxu0 0.0
    %119 = vmatpush.msra.mxu0 0.0
    %120 = vmatpush.msra.mxu0 0.0
    %121 = vmatpush.msra.mxu0 %v73
    %122 = vmatpush.msra.mxu0 %v69
    %123 = vmatpush.msra.mxu0 %v65
    %124 = vmatpush.msra.mxu0 %v61
    %125 = vmatpush.msra.mxu0 %v57
    %126 = vmatpush.msra.mxu0 %v53
    %127 = vmatpush.msra.mxu0 %v49
    %128 = vmatpush.msra.mxu0 %v45
    %129 = vmatpush.msra.mxu0 %v41
    %130 = vmatmul.f32.gmra.mxu0 %v103
    %v131 = vpop.f32.mrf.mxu0
    %v132 = vadd.f32 %v84, %v131
    %133 = vmatmul.f32.gmra.mxu0 %v106
    %v134 = vpop.f32.mrf.mxu0
    %v135 = vadd.f32 %v89, %v134
    %136 = vmatmul.f32.gmra.mxu0 %v109
    %v137 = vpop.f32.mrf.mxu0
    %v138 = vadd.f32 %v94, %v137
    %139 = vmatmul.f32.gmra.mxu0 %v112
    %v140 = vpop.f32.mrf.mxu0
    %v141 = vadd.f32 %v99, %v140
    %142 = vdwg.mxu0
    %143 = vmatpush.msra.mxu0 0.0
    %144 = vmatpush.msra.mxu0 0.0
    %145 = vmatpush.msra.mxu0 0.0
    %146 = vmatpush.msra.mxu0 0.0
    %147 = vmatpush.msra.mxu0 0.0
    %148 = vmatpush.msra.mxu0 0.0
    %149 = vmatpush.msra.mxu0 0.0
    %150 = vmatpush.msra.mxu0 %v74
    %151 = vmatpush.msra.mxu0 %v70
    %152 = vmatpush.msra.mxu0 %v66
    %153 = vmatpush.msra.mxu0 %v62
    %154 = vmatpush.msra.mxu0 %v58
    %155 = vmatpush.msra.mxu0 %v54
    %156 = vmatpush.msra.mxu0 %v50
    %157 = vmatpush.msra.mxu0 %v46
    %158 = vmatpush.msra.mxu0 %v42
    %159 = vmatmul.f32.gmra.mxu0 %v103
    %v160 = vpop.f32.mrf.mxu0
    %v161 = vadd.f32 %v84, %v160
    %162 = vmatmul.f32.gmra.mxu0 %v106
    %v163 = vpop.f32.mrf.mxu0
    %v164 = vadd.f32 %v89, %v163
    %165 = vmatmul.f32.gmra.mxu0 %v109
    %v166 = vpop.f32.mrf.mxu0
    %v167 = vadd.f32 %v94, %v166
    %168 = vmatmul.f32.gmra.mxu0 %v112
    %v169 = vpop.f32.mrf.mxu0
    %v170 = vadd.f32 %v99, %v169
    %171 = vdwg.mxu0
    %172 = vmatpush.msra.mxu0 0.0
    %173 = vmatpush.msra.mxu0 0.0
    %174 = vmatpush.msra.mxu0 0.0
    %175 = vmatpush.msra.mxu0 0.0
    %176 = vmatpush.msra.mxu0 0.0
    %177 = vmatpush.msra.mxu0 0.0
    %178 = vmatpush.msra.mxu0 0.0
    %179 = vmatpush.msra.mxu0 %v75
    %180 = vmatpush.msra.mxu0 %v71
    %181 = vmatpush.msra.mxu0 %v67
    %182 = vmatpush.msra.mxu0 %v63
    %183 = vmatpush.msra.mxu0 %v59
    %184 = vmatpush.msra.mxu0 %v55
    %185 = vmatpush.msra.mxu0 %v51
    %186 = vmatpush.msra.mxu0 %v47
    %187 = vmatpush.msra.mxu0 %v43
    %188 = vmatmul.f32.gmra.mxu0 %v103
    %v189 = vpop.f32.mrf.mxu0
    %v190 = vadd.f32 %v84, %v189
    %191 = vmatmul.f32.gmra.mxu0 %v106
    %v192 = vpop.f32.mrf.mxu0
    %v193 = vadd.f32 %v89, %v192
    %194 = vmatmul.f32.gmra.mxu0 %v109
    %v195 = vpop.f32.mrf.mxu0
    %v196 = vadd.f32 %v94, %v195
    %197 = vmatmul.f32.gmra.mxu0 %v112
    %v198 = vpop.f32.mrf.mxu0
    %v199 = vadd.f32 %v99, %v198
    %200 = vdwg.mxu0
    %201 = vmatpush.msra.mxu0 0.0
    %202 = vmatpush.msra.mxu0 0.0
    %203 = vmatpush.msra.mxu0 0.0
    %204 = vmatpush.msra.mxu0 0.0
    %205 = vmatpush.msra.mxu0 0.0
    %206 = vmatpush.msra.mxu0 0.0
    %207 = vmatpush.msra.mxu0 0.0
    %208 = vmatpush.msra.mxu0 %v76
    %209 = vmatpush.msra.mxu0 %v72
    %210 = vmatpush.msra.mxu0 %v68
    %211 = vmatpush.msra.mxu0 %v64
    %212 = vmatpush.msra.mxu0 %v60
    %213 = vmatpush.msra.mxu0 %v56
    %214 = vmatpush.msra.mxu0 %v52
    %215 = vmatpush.msra.mxu0 %v48
    %216 = vmatpush.msra.mxu0 %v44
    %217 = vmatmul.f32.gmra.mxu0 %v103
    %v218 = vpop.f32.mrf.mxu0
    %v219 = vadd.f32 %v84, %v218
    %220 = vmatmul.f32.gmra.mxu0 %v106
    %v221 = vpop.f32.mrf.mxu0
    %v222 = vadd.f32 %v89, %v221
    %223 = vmatmul.f32.gmra.mxu0 %v109
    %v224 = vpop.f32.mrf.mxu0
    %v225 = vadd.f32 %v94, %v224
    %226 = vmatmul.f32.gmra.mxu0 %v112
    %v227 = vpop.f32.mrf.mxu0
    %v228 = vadd.f32 %v99, %v227
    %229 = vdwg.mxu0
    %v230 = vmax.f32 %v132, 0.0
    %v231 = vmax.f32 %v161, 0.0
    %v232 = vmax.f32 %v190, 0.0
    %v233 = vmax.f32 %v219, 0.0
    %v234 = vmax.f32 %v135, 0.0
    %v235 = vmax.f32 %v164, 0.0
    %v236 = vmax.f32 %v193, 0.0
    %v237 = vmax.f32 %v222, 0.0
    %v238 = vmax.f32 %v138, 0.0
    %v239 = vmax.f32 %v167, 0.0
    %v240 = vmax.f32 %v196, 0.0
    %v241 = vmax.f32 %v225, 0.0
    %v242 = vmax.f32 %v141, 0.0
    %v243 = vmax.f32 %v170, 0.0
    %v244 = vmax.f32 %v199, 0.0
    %v245 = vmax.f32 %v228, 0.0
    %v246 = vld [vmem:[%s3] sm:$0xff]
    %v247 = vld [vmem:[%s3 + $0x8] sm:$0xff]
    %v248 = vld [vmem:[%s3 + $0x10] sm:$0xff]
    %v249 = vld [vmem:[%s3 + $0x18] sm:$0xff]
    %v250 = vld [vmem:[%s3 + $0x20] sm:$0xff]
    %v251 = vld [vmem:[%s3 + $0x28] sm:$0x1f]
    %v252 = vld [vmem:[%s4] sm:$0xff]
    %v253 = vld [vmem:[%s4 + $0x8] sm:$0xff]
    %v254 = vld [vmem:[%s4 + $0x10] sm:$0xff]
    %v255 = vld [vmem:[%s4 + $0x18] sm:$0xff]
    %v256 = vld [vmem:[%s4 + $0x20] sm:$0xff]
    %v257 = vld [vmem:[%s4 + $0x28] sm:$0x1f]
    %259 = vset.pattern.permute.xlu0 0
    %260 = vperm.xlu0 %259, %v252
    %v261 = vpop.permute.xlu0 %260
    %264 = vset.pattern.permute.xlu0 0
    %265 = vperm.xlu0 %264, %v253
    %v266 = vpop.permute.xlu0 %265
    %269 = vset.pattern.permute.xlu0 0
    %270 = vperm.xlu0 %269, %v254
    %v271 = vpop.permute.xlu0 %270
    %274 = vset.pattern.permute.xlu0 0
    %275 = vperm.xlu0 %274, %v255
    %v276 = vpop.permute.xlu0 %275
    %279 = vset.pattern.permute.xlu0 0
    %280 = vperm.xlu0 %279, %v256
    %v281 = vpop.permute.xlu0 %280
    %284 = vset.pattern.permute.xlu0 0
    %285 = vperm.xlu0 %284, %v257
    %v286 = vpop.permute.xlu0 %285
    %vm288 = vcmask 261120
    %v290 = vsel %vm288, %v246, 0
    %v293 = vsel %vm288, %v247, 0
    %v296 = vsel %vm288, %v248, 0
    %v299 = vsel %vm288, %v249, 0
    %v302 = vsel %vm288, %v250, 0
    %v305 = vsel %vm288, %v251, 0
    %307 = vmatpush.msra.mxu0 0.0
    %308 = vmatpush.msra.mxu0 0.0
    %309 = vmatpush.msra.mxu0 0.0
    %310 = vmatpush.msra.mxu0 0.0
    %311 = vmatpush.msra.mxu0 0.0
    %312 = vmatpush.msra.mxu0 0.0
    %313 = vmatpush.msra.mxu0 0.0
    %314 = vmatpush.msra.mxu0 0.0
    %315 = vmatpush.msra.mxu0 0.0
    %316 = vmatpush.msra.mxu0 0.0
    %317 = vmatpush.msra.mxu0 0.0
    %318 = vmatpush.msra.mxu0 0.0
    %319 = vmatpush.msra.mxu0 %v242
    %320 = vmatpush.msra.mxu0 %v238
    %321 = vmatpush.msra.mxu0 %v234
    %322 = vmatpush.msra.mxu0 %v230
    %323 = vmatmul.f32.gmra.mxu0 %v290
    %v324 = vpop.f32.mrf.mxu0
    %v325 = vadd.f32 %v261, %v324
    %326 = vmatmul.f32.gmra.mxu0 %v293
    %v327 = vpop.f32.mrf.mxu0
    %v328 = vadd.f32 %v266, %v327
    %329 = vmatmul.f32.gmra.mxu0 %v296
    %v330 = vpop.f32.mrf.mxu0
    %v331 = vadd.f32 %v271, %v330
    %332 = vmatmul.f32.gmra.mxu0 %v299
    %v333 = vpop.f32.mrf.mxu0
    %v334 = vadd.f32 %v276, %v333
    %335 = vmatmul.f32.gmra.mxu0 %v302
    %v336 = vpop.f32.mrf.mxu0
    %v337 = vadd.f32 %v281, %v336
    %338 = vmatmul.f32.gmra.mxu0 %v305
    %v339 = vpop.f32.mrf.mxu0
    %v340 = vadd.f32 %v286, %v339
    %341 = vdwg.mxu0
    %342 = vmatpush.msra.mxu0 0.0
    %343 = vmatpush.msra.mxu0 0.0
    %344 = vmatpush.msra.mxu0 0.0
    %345 = vmatpush.msra.mxu0 0.0
    %346 = vmatpush.msra.mxu0 0.0
    %347 = vmatpush.msra.mxu0 0.0
    %348 = vmatpush.msra.mxu0 0.0
    %349 = vmatpush.msra.mxu0 0.0
    %350 = vmatpush.msra.mxu0 0.0
    %351 = vmatpush.msra.mxu0 0.0
    %352 = vmatpush.msra.mxu0 0.0
    %353 = vmatpush.msra.mxu0 0.0
    %354 = vmatpush.msra.mxu0 %v243
    %355 = vmatpush.msra.mxu0 %v239
    %356 = vmatpush.msra.mxu0 %v235
    %357 = vmatpush.msra.mxu0 %v231
    %358 = vmatmul.f32.gmra.mxu0 %v290
    %v359 = vpop.f32.mrf.mxu0
    %v360 = vadd.f32 %v261, %v359
    %361 = vmatmul.f32.gmra.mxu0 %v293
    %v362 = vpop.f32.mrf.mxu0
    %v363 = vadd.f32 %v266, %v362
    %364 = vmatmul.f32.gmra.mxu0 %v296
    %v365 = vpop.f32.mrf.mxu0
    %v366 = vadd.f32 %v271, %v365
    %367 = vmatmul.f32.gmra.mxu0 %v299
    %v368 = vpop.f32.mrf.mxu0
    %v369 = vadd.f32 %v276, %v368
    %370 = vmatmul.f32.gmra.mxu0 %v302
    %v371 = vpop.f32.mrf.mxu0
    %v372 = vadd.f32 %v281, %v371
    %373 = vmatmul.f32.gmra.mxu0 %v305
    %v374 = vpop.f32.mrf.mxu0
    %v375 = vadd.f32 %v286, %v374
    %376 = vdwg.mxu0
    %377 = vmatpush.msra.mxu0 0.0
    %378 = vmatpush.msra.mxu0 0.0
    %379 = vmatpush.msra.mxu0 0.0
    %380 = vmatpush.msra.mxu0 0.0
    %381 = vmatpush.msra.mxu0 0.0
    %382 = vmatpush.msra.mxu0 0.0
    %383 = vmatpush.msra.mxu0 0.0
    %384 = vmatpush.msra.mxu0 0.0
    %385 = vmatpush.msra.mxu0 0.0
    %386 = vmatpush.msra.mxu0 0.0
    %387 = vmatpush.msra.mxu0 0.0
    %388 = vmatpush.msra.mxu0 0.0
    %389 = vmatpush.msra.mxu0 %v244
    %390 = vmatpush.msra.mxu0 %v240
    %391 = vmatpush.msra.mxu0 %v236
    %392 = vmatpush.msra.mxu0 %v232
    %393 = vmatmul.f32.gmra.mxu0 %v290
    %v394 = vpop.f32.mrf.mxu0
    %v395 = vadd.f32 %v261, %v394
    %396 = vmatmul.f32.gmra.mxu0 %v293
    %v397 = vpop.f32.mrf.mxu0
    %v398 = vadd.f32 %v266, %v397
    %399 = vmatmul.f32.gmra.mxu0 %v296
    %v400 = vpop.f32.mrf.mxu0
    %v401 = vadd.f32 %v271, %v400
    %402 = vmatmul.f32.gmra.mxu0 %v299
    %v403 = vpop.f32.mrf.mxu0
    %v404 = vadd.f32 %v276, %v403
    %405 = vmatmul.f32.gmra.mxu0 %v302
    %v406 = vpop.f32.mrf.mxu0
    %v407 = vadd.f32 %v281, %v406
    %408 = vmatmul.f32.gmra.mxu0 %v305
    %v409 = vpop.f32.mrf.mxu0
    %v410 = vadd.f32 %v286, %v409
    %411 = vdwg.mxu0
    %412 = vmatpush.msra.mxu0 0.0
    %413 = vmatpush.msra.mxu0 0.0
    %414 = vmatpush.msra.mxu0 0.0
    %415 = vmatpush.msra.mxu0 0.0
    %416 = vmatpush.msra.mxu0 0.0
    %417 = vmatpush.msra.mxu0 0.0
    %418 = vmatpush.msra.mxu0 0.0
    %419 = vmatpush.msra.mxu0 0.0
    %420 = vmatpush.msra.mxu0 0.0
    %421 = vmatpush.msra.mxu0 0.0
    %422 = vmatpush.msra.mxu0 0.0
    %423 = vmatpush.msra.mxu0 0.0
    %424 = vmatpush.msra.mxu0 %v245
    %425 = vmatpush.msra.mxu0 %v241
    %426 = vmatpush.msra.mxu0 %v237
    %427 = vmatpush.msra.mxu0 %v233
    %428 = vmatmul.f32.gmra.mxu0 %v290
    %v429 = vpop.f32.mrf.mxu0
    %v430 = vadd.f32 %v261, %v429
    %431 = vmatmul.f32.gmra.mxu0 %v293
    %v432 = vpop.f32.mrf.mxu0
    %v433 = vadd.f32 %v266, %v432
    %434 = vmatmul.f32.gmra.mxu0 %v296
    %v435 = vpop.f32.mrf.mxu0
    %v436 = vadd.f32 %v271, %v435
    %437 = vmatmul.f32.gmra.mxu0 %v299
    %v438 = vpop.f32.mrf.mxu0
    %v439 = vadd.f32 %v276, %v438
    %440 = vmatmul.f32.gmra.mxu0 %v302
    %v441 = vpop.f32.mrf.mxu0
    %v442 = vadd.f32 %v281, %v441
    %443 = vmatmul.f32.gmra.mxu0 %v305
    %v444 = vpop.f32.mrf.mxu0
    %v445 = vadd.f32 %v286, %v444
    %446 = vdwg.mxu0
    %447 = vst [vmem:[#allocation5] sm:$0xff] %v325
    %448 = vst [vmem:[#allocation5 + $0x8] sm:$0xff] %v360
    %449 = vst [vmem:[#allocation5 + $0x10] sm:$0xff] %v395
    %450 = vst [vmem:[#allocation5 + $0x18] sm:$0xff] %v430
    %451 = vst [vmem:[#allocation5 + $0x20] sm:$0xff] %v328
    %452 = vst [vmem:[#allocation5 + $0x28] sm:$0xff] %v363
    %453 = vst [vmem:[#allocation5 + $0x30] sm:$0xff] %v398
    %454 = vst [vmem:[#allocation5 + $0x38] sm:$0xff] %v433
    %455 = vst [vmem:[#allocation5 + $0x40] sm:$0xff] %v331
    %456 = vst [vmem:[#allocation5 + $0x48] sm:$0xff] %v366
    %457 = vst [vmem:[#allocation5 + $0x50] sm:$0xff] %v401
    %458 = vst [vmem:[#allocation5 + $0x58] sm:$0xff] %v436
    %459 = vst [vmem:[#allocation5 + $0x60] sm:$0xff] %v334
    %460 = vst [vmem:[#allocation5 + $0x68] sm:$0xff] %v369
    %461 = vst [vmem:[#allocation5 + $0x70] sm:$0xff] %v404
    %462 = vst [vmem:[#allocation5 + $0x78] sm:$0xff] %v439
    %463 = vst [vmem:[#allocation5 + $0x80] sm:$0xff] %v337
    %464 = vst [vmem:[#allocation5 + $0x88] sm:$0xff] %v372
    %465 = vst [vmem:[#allocation5 + $0x90] sm:$0xff] %v407
    %466 = vst [vmem:[#allocation5 + $0x98] sm:$0xff] %v442
    %467 = vst [vmem:[#allocation5 + $0xa0] sm:$0x1f] %v340
    %468 = vst [vmem:[#allocation5 + $0xa8] sm:$0x1f] %v375
    %469 = vst [vmem:[#allocation5 + $0xb0] sm:$0x1f] %v410
    %470 = vst [vmem:[#allocation5 + $0xb8] sm:$0x1f] %v445
    // Predicated region
    $region26: #{tpu_custom_call.1} parent=1 // pred_check
      _
    $region27: #{tpu_custom_call.1} parent=1 // pred_check_branch
      %472 = sbr.rel (0) target = $region29
    $region28: #{tpu_custom_call.1} parent=1 // pred_region
      %474 = vsyncadd [#allocation4], 0
      %s475 = sshll.u32 [#allocation5], 4
      %s476 = int_to_ptr.vmem [resolvable:$true] %s475
      %s477 = sshll.u32 %s5, 4
      %s478 = int_to_ptr.hbm [resolvable:$true] %s477
      %483 = dma.vmem_to_hbm [thread:$0]  %s476, 3072, %s478, [#allocation4], 512, 512, 32
    $region29: #{tpu_custom_call.1} parent=1 // pred_fallthru
      _
    // Predicated region
    $region30: #{tpu_custom_call.1} parent=1 // pred_check
      _
    $region31: #{tpu_custom_call.1} parent=1 // pred_check_branch
      %485 = sbr.rel (0) target = $region33
    $region32: #{tpu_custom_call.1} parent=1 // pred_region
      %487 = dma.done [#allocation4], 3072
    $region33: #{tpu_custom_call.1} parent=1 // pred_fallthru
      _
    %488 = vsyncpa [#allocation3], 1
    %489 = vsyncpa [#allocation4], 1

</llo_original>
